<compile_context>
chip_gen: v5e
topology: v5e:2x2
jax: 0.10.0
libtpu: 0.0.40
codegen_flags: <defaults>
</compile_context>

<pallas_src>
import functools

import jax
import jax.numpy as jnp
from jax.experimental import pallas as pl
from jax.experimental.pallas import tpu as pltpu

HIDDEN = 128


def _round_up(x, m):
    return ((x + m - 1) // m) * m


def ddqn_kernel(x_ref, w_ref, b_ref, out_ref, psum_ref,
                *, k1, num_inputs, num_outputs, batch, tile_b):
    t = pl.program_id(0)

    # Static, aligned views into the packed parameter slabs.
    w1 = w_ref[0:num_inputs, 0:HIDDEN]                    # (ni, 128)   bf16
    w_h1 = w_ref[k1:k1 + HIDDEN, :]                       # (128, 256)  bf16
    w_h2 = w_ref[k1 + HIDDEN:k1 + 3 * HIDDEN, 0:HIDDEN]   # (256, 128)  bf16
    b1 = b_ref[:, 0:HIDDEN]                               # (1, 128)    f32
    b_h1 = b_ref[:, HIDDEN:3 * HIDDEN]                    # (1, 256)    f32
    b_h2 = b_ref[:, 3 * HIDDEN:4 * HIDDEN]                # (1, 128)    f32

    x = x_ref[...].astype(jnp.bfloat16)                   # (TB, ni)

    # feature: Linear + ReLU (f32 accumulate on MXU, f32 epilogue, back to bf16)
    h = jnp.dot(x, w1, preferred_element_type=jnp.float32) + b1
    h = jnp.maximum(h, 0.0).astype(jnp.bfloat16)          # (TB, 128)

    # fused first layer of both heads: [adv_hidden | val_hidden]
    hh = jnp.dot(h, w_h1, preferred_element_type=jnp.float32) + b_h1
    hh = jnp.maximum(hh, 0.0).astype(jnp.bfloat16)        # (TB, 256)

    # fused second layer.  Columns [0:no] = val + adv_c (value weights replicated
    # at pack time), column [no] = val, remaining columns = 0.
    o2 = jnp.dot(hh, w_h2, preferred_element_type=jnp.float32) + b_h2  # (TB, 128)

    # Lane-dense 128-wide store (wrapper slices [:, :num_outputs]).
    out_ref[...] = o2

    # Per-tile column partial sums over the REAL batch rows only (padded rows of x
    # are zero but still produce relu(b1)-driven values, so they must be masked).
    if batch % tile_b == 0:
        o2_valid = o2
    else:
        row = jax.lax.broadcasted_iota(jnp.int32, (tile_b, HIDDEN), 0) + t * tile_b
        o2_valid = jnp.where(row < batch, o2, 0.0)
    colsum = jnp.sum(o2_valid, axis=0, keepdims=True)      # (1, 128)
    # (8, 128) block keeps the partial-sum output tile-aligned; rows are replicas.
    psum_ref[...] = jnp.broadcast_to(colsum, (8, HIDDEN))


def pack_params(params, num_inputs, num_outputs):
    """Pack all 10 parameter tensors into one bf16 weight slab + one f32 bias slab.

    Head-layer-2 packing trick: the value projection wv2/bv2 is replicated into the
    advantage output columns, so the fused matmul directly produces (val + adv) in
    columns [0:num_outputs] and pure val in column [num_outputs].
    """
    (w1, b1, wa1, ba1, wa2, ba2, wv1, bv1, wv2, bv2) = params
    assert num_outputs + 1 <= HIDDEN, "value column must fit in the 128-wide output slab"
    k1 = _round_up(max(num_inputs, 8), 128)   # aligned row offset for the head weights

    ncol = 2 * HIDDEN  # 256
    w_pack = jnp.zeros((k1 + 3 * HIDDEN, ncol), jnp.float32)
    w_pack = w_pack.at[:num_inputs, :HIDDEN].set(w1)                         # feature
    w_pack = w_pack.at[k1:k1 + HIDDEN, :HIDDEN].set(wa1)                     # head L1 (adv)
    w_pack = w_pack.at[k1:k1 + HIDDEN, HIDDEN:].set(wv1)                     # head L1 (val)
    # head L2: adv rows
    w_pack = w_pack.at[k1 + HIDDEN:k1 + 2 * HIDDEN, :num_outputs].set(wa2)
    # head L2: val rows, replicated across the adv columns + a pure-val column
    w_pack = w_pack.at[k1 + 2 * HIDDEN:k1 + 3 * HIDDEN, :num_outputs].set(
        jnp.broadcast_to(wv2, (HIDDEN, num_outputs)))
    w_pack = w_pack.at[k1 + 2 * HIDDEN:k1 + 3 * HIDDEN,
                       num_outputs:num_outputs + 1].set(wv2)
    w_pack = w_pack.astype(jnp.bfloat16)

    b_pack = jnp.zeros((1, 4 * HIDDEN), jnp.float32)
    b_pack = b_pack.at[:, :HIDDEN].set(b1)
    b_pack = b_pack.at[:, HIDDEN:2 * HIDDEN].set(ba1)
    b_pack = b_pack.at[:, 2 * HIDDEN:3 * HIDDEN].set(bv1)
    b_pack = b_pack.at[:, 3 * HIDDEN:3 * HIDDEN + num_outputs].set(ba2 + bv2[0, 0])
    b_pack = b_pack.at[:, 3 * HIDDEN + num_outputs:
                          3 * HIDDEN + num_outputs + 1].set(bv2)
    return w_pack, b_pack, k1


def ddqn_forward(x, packed, num_outputs, tile_b=1024):
    w_pack, b_pack, k1 = packed
    B, num_inputs = x.shape

    tb = _round_up(min(tile_b, _round_up(B, 8)), 8)
    b_pad = _round_up(B, tb)
    n_tiles = b_pad // tb

    xp = x if b_pad == B else jnp.pad(x, ((0, b_pad - B), (0, 0)))

    kernel = functools.partial(ddqn_kernel, k1=k1, num_inputs=num_inputs,
                               num_outputs=num_outputs, batch=B, tile_b=tb)

    out_full, psums = pl.pallas_call(
        kernel,
        out_shape=(jax.ShapeDtypeStruct((b_pad, HIDDEN), jnp.float32),
                   jax.ShapeDtypeStruct((8 * n_tiles, HIDDEN), jnp.float32)),
        grid_spec=pltpu.PrefetchScalarGridSpec(
            num_scalar_prefetch=0,
            grid=(n_tiles,),                                   # single pass over batch tiles
            in_specs=[
                pl.BlockSpec((tb, num_inputs), lambda t: (t, 0)),   # x at natural width
                pl.BlockSpec(w_pack.shape, lambda t: (0, 0)),       # weights VMEM-resident
                pl.BlockSpec(b_pack.shape, lambda t: (0, 0)),
            ],
            out_specs=(
                pl.BlockSpec((tb, HIDDEN), lambda t: (t, 0)),       # lane-dense 128-wide slab
                pl.BlockSpec((8, HIDDEN), lambda t: (t, 0)),        # per-tile column sums
            ),
        ),
        compiler_params=pltpu.CompilerParams(
            dimension_semantics=("parallel",)),                     # megacore-shardable on v7x
    )(xp, w_pack, b_pack)

    # Recover the global adv mean from the per-tile column sums:
    #   col_tot[c<no] = sum(val) + sum(adv_c),  col_tot[no] = sum(val)
    col_tot = psums.reshape(n_tiles, 8, HIDDEN)[:, 0, :].sum(axis=0)       # (128,)
    adv_sum = jnp.sum(col_tot[:num_outputs]) - num_outputs * col_tot[num_outputs]
    mean = adv_sum / float(B * num_outputs)

    return out_full[:B, :num_outputs] - mean


def init_params(key, num_inputs, num_outputs, hidden=HIDDEN):
    """Deterministic init (Kaiming-uniform-ish like PyTorch Linear default)."""
    ks = jax.random.split(key, 10)

    def linear(kw, kb, fan_in, fan_out):
        bound = 1.0 / jnp.sqrt(float(fan_in))
        w = jax.random.uniform(kw, (fan_in, fan_out), jnp.float32, -bound, bound)
        b = jax.random.uniform(kb, (1, fan_out), jnp.float32, -bound, bound)
        return w, b

    w1, b1 = linear(ks[0], ks[1], num_inputs, hidden)
    wa1, ba1 = linear(ks[2], ks[3], hidden, hidden)
    wa2, ba2 = linear(ks[4], ks[5], hidden, num_outputs)
    wv1, bv1 = linear(ks[6], ks[7], hidden, hidden)
    wv2, bv2 = linear(ks[8], ks[9], hidden, 1)
    return (w1, b1, wa1, ba1, wa2, ba2, wv1, bv1, wv2, bv2)


def ddqn_reference(x, params):
    """Pure-JAX f32 reference for correctness checking."""
    (w1, b1, wa1, ba1, wa2, ba2, wv1, bv1, wv2, bv2) = params
    h = jax.nn.relu(x @ w1 + b1)
    adv = jax.nn.relu(h @ wa1 + ba1) @ wa2 + ba2
    val = jax.nn.relu(h @ wv1 + bv1) @ wv2 + bv2
    return val + adv - jnp.mean(adv)


if __name__ == "__main__":
    key = jax.random.PRNGKey(0)
    k_x, k_p, k_x2 = jax.random.split(key, 3)

    num_inputs, num_outputs = 32, 8
    params = init_params(k_p, num_inputs, num_outputs)
    packed = pack_params(params, num_inputs, num_outputs)

    # small batch: single grid point
    x_small = jax.random.normal(k_x, (8, num_inputs), jnp.float32)
    out_small = jax.block_until_ready(ddqn_forward(x_small, packed, num_outputs))
    ref_small = ddqn_reference(x_small, params)
    assert out_small.shape == (8, num_outputs)
    # bf16 matmul inputs -> relaxed tolerance vs the f32 reference (intentional)
    assert jnp.allclose(out_small, ref_small, atol=5e-2, rtol=5e-2), "small-batch mismatch"

    # batch NOT a multiple of the tile, small tile_b to exercise the multi-tile
    # grid, row masking and the cross-tile global adv.mean()
    x_big = jax.random.normal(k_x2, (500, num_inputs), jnp.float32)
    out_big = jax.block_until_ready(ddqn_forward(x_big, packed, num_outputs, tile_b=128))
    ref_big = ddqn_reference(x_big, params)
    assert out_big.shape == (500, num_outputs)
    assert jnp.allclose(out_big, ref_big, atol=5e-2, rtol=5e-2), "large-batch mismatch"

    print("KERNEL_OK")
</pallas_src>

<mosaic_0001>
module attributes {stable_mosaic.version = 11 : i64} {
  func.func @ddqn_kernel(%arg0: i32, %arg1: memref<8x32xf32, #tpu.memory_space<vmem>>, %arg2: memref<512x256xbf16, #tpu.memory_space<vmem>>, %arg3: memref<1x512xf32, #tpu.memory_space<vmem>>, %arg4: memref<8x128xf32, #tpu.memory_space<vmem>>, %arg5: memref<8x128xf32, #tpu.memory_space<vmem>>) attributes {dimension_semantics = [#tpu.dimension_semantics<parallel>], iteration_bounds = array<i64: 1>, scalar_prefetch = 0 : i64, scratch_operands = 0 : i64, tpu.core_type = #tpu.core_type<tc>, window_params = [{transform_indices = @transform_0, window_bounds = array<i64: 8, 32>}, {pipeline_mode = #tpu.pipeline_mode<synchronous>, transform_indices = @transform_1, window_bounds = array<i64: 512, 256>}, {pipeline_mode = #tpu.pipeline_mode<synchronous>, transform_indices = @transform_2, window_bounds = array<i64: 1, 512>}, {transform_indices = @transform_3, window_bounds = array<i64: 8, 128>}, {transform_indices = @transform_4, window_bounds = array<i64: 8, 128>}]} {
    %c0 = arith.constant 0 : index
    %c0_0 = arith.constant 0 : index
    %0 = vector.load %arg2[%c0, %c0_0] : memref<512x256xbf16, #tpu.memory_space<vmem>>, vector<32x128xbf16>
    %c128 = arith.constant 128 : index
    %c0_1 = arith.constant 0 : index
    %1 = vector.load %arg2[%c128, %c0_1] : memref<512x256xbf16, #tpu.memory_space<vmem>>, vector<128x256xbf16>
    %c256 = arith.constant 256 : index
    %c0_2 = arith.constant 0 : index
    %2 = vector.load %arg2[%c256, %c0_2] : memref<512x256xbf16, #tpu.memory_space<vmem>>, vector<256x128xbf16>
    %c0_3 = arith.constant 0 : index
    %c0_4 = arith.constant 0 : index
    %3 = vector.load %arg3[%c0_3, %c0_4] : memref<1x512xf32, #tpu.memory_space<vmem>>, vector<1x128xf32>
    %c0_5 = arith.constant 0 : index
    %c128_6 = arith.constant 128 : index
    %4 = vector.load %arg3[%c0_5, %c128_6] : memref<1x512xf32, #tpu.memory_space<vmem>>, vector<1x256xf32>
    %c0_7 = arith.constant 0 : index
    %c384 = arith.constant 384 : index
    %5 = vector.load %arg3[%c0_7, %c384] : memref<1x512xf32, #tpu.memory_space<vmem>>, vector<1x128xf32>
    %c0_8 = arith.constant 0 : index
    %c0_9 = arith.constant 0 : index
    %6 = vector.load %arg1[%c0_8, %c0_9] : memref<8x32xf32, #tpu.memory_space<vmem>>, vector<8x32xf32>
    %7 = arith.truncf %6 : vector<8x32xf32> to vector<8x32xbf16>
    %cst = arith.constant dense<0.000000e+00> : vector<8x128xf32>
    %8 = tpu.matmul %7, %0, %cst {dimension_numbers = #tpu.dot_dimension_numbers<[1], [0], [0], [1], [0, 0, 1, 1], [], []>} : vector<8x32xbf16>, vector<32x128xbf16>, vector<8x128xf32> -> vector<8x128xf32>
    %9 = vector.broadcast %3 : vector<1x128xf32> to vector<8x128xf32>
    %10 = arith.addf %8, %9 : vector<8x128xf32>
    %cst_10 = arith.constant 0.000000e+00 : f32
    %11 = vector.broadcast %cst_10 : f32 to vector<8x128xf32>
    %12 = arith.maximumf %10, %11 : vector<8x128xf32>
    %13 = arith.truncf %12 : vector<8x128xf32> to vector<8x128xbf16>
    %cst_11 = arith.constant dense<0.000000e+00> : vector<8x256xf32>
    %14 = tpu.matmul %13, %1, %cst_11 {dimension_numbers = #tpu.dot_dimension_numbers<[1], [0], [0], [1], [0, 0, 1, 1], [], []>} : vector<8x128xbf16>, vector<128x256xbf16>, vector<8x256xf32> -> vector<8x256xf32>
    %15 = vector.broadcast %4 : vector<1x256xf32> to vector<8x256xf32>
    %16 = arith.addf %14, %15 : vector<8x256xf32>
    %cst_12 = arith.constant 0.000000e+00 : f32
    %17 = vector.broadcast %cst_12 : f32 to vector<8x256xf32>
    %18 = arith.maximumf %16, %17 : vector<8x256xf32>
    %19 = arith.truncf %18 : vector<8x256xf32> to vector<8x256xbf16>
    %cst_13 = arith.constant dense<0.000000e+00> : vector<8x128xf32>
    %20 = tpu.matmul %19, %2, %cst_13 {dimension_numbers = #tpu.dot_dimension_numbers<[1], [0], [0], [1], [0, 0, 1, 1], [], []>} : vector<8x256xbf16>, vector<256x128xbf16>, vector<8x128xf32> -> vector<8x128xf32>
    %21 = vector.broadcast %5 : vector<1x128xf32> to vector<8x128xf32>
    %22 = arith.addf %20, %21 : vector<8x128xf32>
    %c0_14 = arith.constant 0 : index
    %c0_15 = arith.constant 0 : index
    %23 = vector.load %arg4[%c0_14, %c0_15] : memref<8x128xf32, #tpu.memory_space<vmem>>, vector<8x128xf32>
    tpu.vector_store %arg4[%c0_14, %c0_15], %22 {strides = array<i32>} : memref<8x128xf32, #tpu.memory_space<vmem>>, vector<8x128xf32>,
    %cst_16 = arith.constant dense<0.000000e+00> : vector<128xf32>
    %24 = vector.multi_reduction <add>, %22, %cst_16 [0] : vector<8x128xf32> to vector<128xf32>
    %25 = vector.shape_cast %24 : vector<128xf32> to vector<1x128xf32>
    %26 = vector.shape_cast %25 : vector<1x128xf32> to vector<1x128xf32>
    %27 = vector.broadcast %26 : vector<1x128xf32> to vector<8x128xf32>
    %c0_17 = arith.constant 0 : index
    %c0_18 = arith.constant 0 : index
    %28 = vector.load %arg5[%c0_17, %c0_18] : memref<8x128xf32, #tpu.memory_space<vmem>>, vector<8x128xf32>
    tpu.vector_store %arg5[%c0_17, %c0_18], %27 {strides = array<i32>} : memref<8x128xf32, #tpu.memory_space<vmem>>, vector<8x128xf32>,
    return
  }
  func.func @transform_0(%arg0: i32) -> (i32, i32) {
    %c0_i32 = arith.constant 0 : i32
    %c0_i32_0 = arith.constant 0 : i32
    return %arg0, %c0_i32 : i32, i32
  }
  func.func @transform_1(%arg0: i32) -> (i32, i32) {
    %c0_i32 = arith.constant 0 : i32
    %c0_i32_0 = arith.constant 0 : i32
    %c0_i32_1 = arith.constant 0 : i32
    return %c0_i32, %c0_i32_0 : i32, i32
  }
  func.func @transform_2(%arg0: i32) -> (i32, i32) {
    %c0_i32 = arith.constant 0 : i32
    %c0_i32_0 = arith.constant 0 : i32
    %c0_i32_1 = arith.constant 0 : i32
    return %c0_i32, %c0_i32_0 : i32, i32
  }
  func.func @transform_3(%arg0: i32) -> (i32, i32) {
    %c0_i32 = arith.constant 0 : i32
    %c0_i32_0 = arith.constant 0 : i32
    return %arg0, %c0_i32 : i32, i32
  }
  func.func @transform_4(%arg0: i32) -> (i32, i32) {
    %c0_i32 = arith.constant 0 : i32
    %c0_i32_0 = arith.constant 0 : i32
    return %arg0, %c0_i32 : i32, i32
  }
}

</mosaic_0001>

<llo_original>
// kernel: tpu_custom_call.1
$region0: #{tpu_custom_call.1}
  #allocation0 [shape = 'u32[]', space=smem, size = 0x4, offset = 0x4, fixed_abs, tag = 'smem constant byte address 0x4 - core index']
  #allocation1 [shape = 'u32[72,128]{1,0:T(1,128)}', space=vmem, size = 0x9000, scoped, tag = 'internal scratch']
  %s0 = inlined_call_operand.hbm [shape: f32[8,32], index: 0, kind: input, shape index: {}]
  %s1 = inlined_call_operand.hbm [shape: bf16[512,256], index: 1, kind: input, shape index: {}]
  %s2 = inlined_call_operand.hbm [shape: f32[1,512], index: 2, kind: input, shape index: {}]
  %s3 = inlined_call_operand.hbm [shape: f32[8,128], index: 3, kind: output, shape index: {0}]
  %s4 = inlined_call_operand.hbm [shape: f32[8,128], index: 4, kind: output, shape index: {1}]
  %5 = xla_tuple %s3, %s4
  %s6 = sld [smem:[#allocation0]]
  $region42: #{tpu_custom_call.1} parent=0
    _
  %s8 = ssub.s32 1, %s6
  %s9 = scalar_select 0, %s8, %s6
  $region1: #{tpu_custom_call.1} parent=0
    #allocation2 [shape = 'u8[4096]{0}', space=vmem, size = 0x1000, scoped, tag = 'input window, operand 0, single buffered']
    #allocation3 [shape = 's32[1]{0}', space=sflag, size = 0x4, scoped, tag = 'scoped memory for tpu_custom_call.1']
    #allocation4 [shape = 's32[1]{0}', space=sflag, size = 0x4, scoped, tag = 'scoped memory for tpu_custom_call.1']
    #allocation5 [shape = 'u8[262144]{0}', space=vmem, size = 0x40000, scoped, tag = 'input window, operand 1, single buffered']
    #allocation6 [shape = 's32[1]{0}', space=sflag, size = 0x4, scoped, tag = 'scoped memory for tpu_custom_call.1']
    #allocation7 [shape = 'u8[2048]{0}', space=vmem, size = 0x800, scoped, tag = 'input window, operand 2, single buffered']
    #allocation8 [shape = 'u8[4096]{0}', space=vmem, size = 0x1000, scoped, tag = 'output window, operand 0, single buffered']
    #allocation9 [shape = 'u8[4096]{0}', space=vmem, size = 0x1000, scoped, tag = 'output window, operand 1, single buffered']
    #allocation10 [shape = 's32[1]{0}', space=sflag, size = 0x4, scoped, tag = 'scoped memory for tpu_custom_call.1']
    %10 = vsyncpa [#allocation3], 0
    %11 = vsyncpa [#allocation6], 0
    %12 = vsyncpa [#allocation4], 0
    %13 = vsyncpa [#allocation10], 0
    // Predicated region
    $region2: #{tpu_custom_call.1} parent=1 // pred_check
      _
    $region3: #{tpu_custom_call.1} parent=1 // pred_check_branch
      %15 = sbr.rel (0) target = $region5
    $region4: #{tpu_custom_call.1} parent=1 // pred_region
      %17 = vsyncadd [#allocation3], 0
      %s19 = sshll.u32 %s0, 4
      %s20 = int_to_ptr.hbm [resolvable:$true] %s19
      %s21 = sshll.u32 [#allocation2], 4
      %s22 = int_to_ptr.vmem [resolvable:$true] %s21
      %24 = dma.hbm_to_vmem [thread:$0]  %s20, 128, %s22, [#allocation3]
    $region5: #{tpu_custom_call.1} parent=1 // pred_fallthru
      _
    // Predicated region
    $region6: #{tpu_custom_call.1} parent=1 // pred_check
      _
    $region7: #{tpu_custom_call.1} parent=1 // pred_check_branch
      %26 = sbr.rel (0) target = $region9
    $region8: #{tpu_custom_call.1} parent=1 // pred_region
      %28 = vsyncadd [#allocation6], 0
      %s29 = sshll.u32 %s1, 4
      %s30 = int_to_ptr.hbm [resolvable:$true] %s29
      %s31 = sshll.u32 [#allocation5], 4
      %s32 = int_to_ptr.vmem [resolvable:$true] %s31
      %37 = dma.hbm_to_vmem [thread:$0]  %s30, 8192, %s32, [#allocation6], 128, 128, 8
    $region9: #{tpu_custom_call.1} parent=1 // pred_fallthru
      _
    // Predicated region
    $region10: #{tpu_custom_call.1} parent=1 // pred_check
      _
    $region11: #{tpu_custom_call.1} parent=1 // pred_check_branch
      %39 = sbr.rel (0) target = $region13
    $region12: #{tpu_custom_call.1} parent=1 // pred_region
      %41 = vsyncadd [#allocation6], 0
      %s43 = sshll.u32 %s2, 4
      %s44 = int_to_ptr.hbm [resolvable:$true] %s43
      %s45 = sshll.u32 [#allocation7], 4
      %s46 = int_to_ptr.vmem [resolvable:$true] %s45
      %48 = dma.hbm_to_vmem [thread:$0]  %s44, 64, %s46, [#allocation6]
    $region13: #{tpu_custom_call.1} parent=1 // pred_fallthru
      _
    // Predicated region
    $region14: #{tpu_custom_call.1} parent=1 // pred_check
      _
    $region15: #{tpu_custom_call.1} parent=1 // pred_check_branch
      %50 = sbr.rel (0) target = $region17
    $region16: #{tpu_custom_call.1} parent=1 // pred_region
      %52 = dma.done [#allocation3], 128
    $region17: #{tpu_custom_call.1} parent=1 // pred_fallthru
      _
    // Predicated region
    $region18: #{tpu_custom_call.1} parent=1 // pred_check
      _
    $region19: #{tpu_custom_call.1} parent=1 // pred_check_branch
      %54 = sbr.rel (0) target = $region21
    $region20: #{tpu_custom_call.1} parent=1 // pred_region
      %56 = dma.done [#allocation6], 8192
    $region21: #{tpu_custom_call.1} parent=1 // pred_fallthru
      _
    // Predicated region
    $region22: #{tpu_custom_call.1} parent=1 // pred_check
      _
    $region23: #{tpu_custom_call.1} parent=1 // pred_check_branch
      %58 = sbr.rel (0) target = $region25
    $region24: #{tpu_custom_call.1} parent=1 // pred_region
      %60 = dma.done [#allocation6], 64
    $region25: #{tpu_custom_call.1} parent=1 // pred_fallthru
      _
    %v62 = vld [vmem:[#allocation5] sm:$0xf]
    %v63 = vld [vmem:[#allocation5 + $0x8] sm:$0xf]
    %v64 = vld [vmem:[#allocation5 + $0x10] sm:$0xf]
    %v65 = vld [vmem:[#allocation5 + $0x18] sm:$0xf]
    %v66 = vld [vmem:[#allocation5 + $0x80] sm:$0xff]
    %v67 = vld [vmem:[#allocation5 + $0x88] sm:$0xff]
    %v68 = vld [vmem:[#allocation5 + $0x90] sm:$0xff]
    %v69 = vld [vmem:[#allocation5 + $0x98] sm:$0xff]
    %v70 = vld [vmem:[#allocation5 + $0xa0] sm:$0xff]
    %v71 = vld [vmem:[#allocation5 + $0xa8] sm:$0xff]
    %v72 = vld [vmem:[#allocation5 + $0xb0] sm:$0xff]
    %v73 = vld [vmem:[#allocation5 + $0xb8] sm:$0xff]
    %v74 = vld [vmem:[#allocation5 + $0xc0] sm:$0xff]
    %v75 = vld [vmem:[#allocation5 + $0xc8] sm:$0xff]
    %v76 = vld [vmem:[#allocation5 + $0xd0] sm:$0xff]
    %v77 = vld [vmem:[#allocation5 + $0xd8] sm:$0xff]
    %v78 = vld [vmem:[#allocation5 + $0xe0] sm:$0xff]
    %v79 = vld [vmem:[#allocation5 + $0xe8] sm:$0xff]
    %v80 = vld [vmem:[#allocation5 + $0xf0] sm:$0xff]
    %v81 = vld [vmem:[#allocation5 + $0xf8] sm:$0xff]
    %v82 = vld [vmem:[#allocation5 + $0x100] sm:$0xf]
    %v83 = vld [vmem:[#allocation5 + $0x108] sm:$0xf]
    %v84 = vld [vmem:[#allocation5 + $0x110] sm:$0xf]
    %v85 = vld [vmem:[#allocation5 + $0x118] sm:$0xf]
    %v86 = vld [vmem:[#allocation5 + $0x120] sm:$0xf]
    %v87 = vld [vmem:[#allocation5 + $0x128] sm:$0xf]
    %v88 = vld [vmem:[#allocation5 + $0x130] sm:$0xf]
    %v89 = vld [vmem:[#allocation5 + $0x138] sm:$0xf]
    %v90 = vld [vmem:[#allocation5 + $0x140] sm:$0xf]
    %v91 = vld [vmem:[#allocation5 + $0x148] sm:$0xf]
    %v92 = vld [vmem:[#allocation5 + $0x150] sm:$0xf]
    %v93 = vld [vmem:[#allocation5 + $0x158] sm:$0xf]
    %v94 = vld [vmem:[#allocation5 + $0x160] sm:$0xf]
    %v95 = vld [vmem:[#allocation5 + $0x168] sm:$0xf]
    %v96 = vld [vmem:[#allocation5 + $0x170] sm:$0xf]
    %v97 = vld [vmem:[#allocation5 + $0x178] sm:$0xf]
    %v98 = vld [vmem:[#allocation5 + $0x180] sm:$0xf]
    %v99 = vld [vmem:[#allocation5 + $0x188] sm:$0xf]
    %v100 = vld [vmem:[#allocation5 + $0x190] sm:$0xf]
    %v101 = vld [vmem:[#allocation5 + $0x198] sm:$0xf]
    %v102 = vld [vmem:[#allocation5 + $0x1a0] sm:$0xf]
    %v103 = vld [vmem:[#allocation5 + $0x1a8] sm:$0xf]
    %v104 = vld [vmem:[#allocation5 + $0x1b0] sm:$0xf]
    %v105 = vld [vmem:[#allocation5 + $0x1b8] sm:$0xf]
    %v106 = vld [vmem:[#allocation5 + $0x1c0] sm:$0xf]
    %v107 = vld [vmem:[#allocation5 + $0x1c8] sm:$0xf]
    %v108 = vld [vmem:[#allocation5 + $0x1d0] sm:$0xf]
    %v109 = vld [vmem:[#allocation5 + $0x1d8] sm:$0xf]
    %v110 = vld [vmem:[#allocation5 + $0x1e0] sm:$0xf]
    %v111 = vld [vmem:[#allocation5 + $0x1e8] sm:$0xf]
    %v112 = vld [vmem:[#allocation5 + $0x1f0] sm:$0xf]
    %v113 = vld [vmem:[#allocation5 + $0x1f8] sm:$0xf]
    %v114 = vld [vmem:[#allocation7] sm:$0x1]
    %v115 = vld [vmem:[#allocation7 + $0x1] sm:$0x3]
    %v116 = vld [vmem:[#allocation7 + $0x3] sm:$0x1]
    %v117 = vld [vmem:[#allocation2] sm:$0xff]
    %v118 = vpack.c.bf16 %v117, %v117
    %v120 = vperm.slane %v114, 0
    %v126 = vunpack.c.l.b16 %v62
    %v127 = vunpack.c.l.b16 %v63
    %v128 = vunpack.c.l.b16 %v64
    %v129 = vunpack.c.l.b16 %v65
    %v130 = vpack.c.b16 %v127, %v126
    %v131 = vpack.c.b16 %v129, %v128
    %vm134 = vcmask 261120
    %v136 = vsel %vm134, %v118, 0
    %138 = vmatpush.bf16.msra.mxu0 0
    %139 = vmatpush.bf16.msra.mxu0 0
    %140 = vmatpush.bf16.msra.mxu0 0
    %141 = vmatpush.bf16.msra.mxu0 0
    %142 = vmatpush.bf16.msra.mxu0 0
    %143 = vmatpush.bf16.msra.mxu0 0
    %144 = vmatpush.bf16.msra.mxu0 %v131
    %145 = vmatpush.bf16.msra.mxu0 %v130
    %146 = vmatmul.bf16.gmra.mxu0 %v136
    %v147 = vpop.f32.mrf.mxu0
    %v148 = vadd.f32 %v120, %v147
    %v149 = vpop.f32.mrf.mxu0
    %150 = vdwg.mxu0
    %v151 = vmax.f32 %v148, 0.0
    %v152 = vpack.c.bf16 %v151, %v151
    %v154 = vperm.slane %v115, 0
    %v155 = vperm.slane %v115, 1
    %v174 = vunpack.c.l.b16 %v66
    %v175 = vunpack.c.h.b16 %v66
    %v176 = vunpack.c.l.b16 %v67
    %v177 = vunpack.c.h.b16 %v67
    %v178 = vunpack.c.l.b16 %v68
    %v179 = vunpack.c.h.b16 %v68
    %v180 = vunpack.c.l.b16 %v69
    %v181 = vunpack.c.h.b16 %v69
    %v182 = vunpack.c.l.b16 %v70
    %v183 = vunpack.c.h.b16 %v70
    %v184 = vunpack.c.l.b16 %v71
    %v185 = vunpack.c.h.b16 %v71
    %v186 = vunpack.c.l.b16 %v72
    %v187 = vunpack.c.h.b16 %v72
    %v188 = vunpack.c.l.b16 %v73
    %v189 = vunpack.c.h.b16 %v73
    %v190 = vunpack.c.l.b16 %v74
    %v191 = vunpack.c.h.b16 %v74
    %v192 = vunpack.c.l.b16 %v75
    %v193 = vunpack.c.h.b16 %v75
    %v194 = vunpack.c.l.b16 %v76
    %v195 = vunpack.c.h.b16 %v76
    %v196 = vunpack.c.l.b16 %v77
    %v197 = vunpack.c.h.b16 %v77
    %v198 = vunpack.c.l.b16 %v78
    %v199 = vunpack.c.h.b16 %v78
    %v200 = vunpack.c.l.b16 %v79
    %v201 = vunpack.c.h.b16 %v79
    %v202 = vunpack.c.l.b16 %v80
    %v203 = vunpack.c.h.b16 %v80
    %v204 = vunpack.c.l.b16 %v81
    %v205 = vunpack.c.h.b16 %v81
    %v206 = vpack.c.b16 %v176, %v174
    %v207 = vpack.c.b16 %v177, %v175
    %v208 = vpack.c.b16 %v180, %v178
    %v209 = vpack.c.b16 %v181, %v179
    %v210 = vpack.c.b16 %v184, %v182
    %v211 = vpack.c.b16 %v185, %v183
    %v212 = vpack.c.b16 %v188, %v186
    %v213 = vpack.c.b16 %v189, %v187
    %v214 = vpack.c.b16 %v192, %v190
    %v215 = vpack.c.b16 %v193, %v191
    %v216 = vpack.c.b16 %v196, %v194
    %v217 = vpack.c.b16 %v197, %v195
    %v218 = vpack.c.b16 %v200, %v198
    %v219 = vpack.c.b16 %v201, %v199
    %v220 = vpack.c.b16 %v204, %v202
    %v221 = vpack.c.b16 %v205, %v203
    %238 = vmatpush.bf16.msra.mxu0 %v220
    %239 = vmatpush.bf16.msra.mxu0 %v218
    %240 = vmatpush.bf16.msra.mxu0 %v216
    %241 = vmatpush.bf16.msra.mxu0 %v214
    %242 = vmatpush.bf16.msra.mxu0 %v212
    %243 = vmatpush.bf16.msra.mxu0 %v210
    %244 = vmatpush.bf16.msra.mxu0 %v208
    %245 = vmatpush.bf16.msra.mxu0 %v206
    %246 = vmatmul.bf16.gmra.mxu0 %v152
    %v247 = vpop.f32.mrf.mxu0
    %v248 = vadd.f32 %v154, %v247
    %v249 = vpop.f32.mrf.mxu0
    %250 = vdwg.mxu0
    %251 = vmatpush.bf16.msra.mxu0 %v221
    %252 = vmatpush.bf16.msra.mxu0 %v219
    %253 = vmatpush.bf16.msra.mxu0 %v217
    %254 = vmatpush.bf16.msra.mxu0 %v215
    %255 = vmatpush.bf16.msra.mxu0 %v213
    %256 = vmatpush.bf16.msra.mxu0 %v211
    %257 = vmatpush.bf16.msra.mxu0 %v209
    %258 = vmatpush.bf16.msra.mxu0 %v207
    %259 = vmatmul.bf16.gmra.mxu0 %v152
    %v260 = vpop.f32.mrf.mxu0
    %v261 = vadd.f32 %v155, %v260
    %v262 = vpop.f32.mrf.mxu0
    %263 = vdwg.mxu0
    %v264 = vmax.f32 %v248, 0.0
    %v265 = vmax.f32 %v261, 0.0
    %v266 = vpack.c.bf16 %v264, %v264
    %v267 = vpack.c.bf16 %v265, %v265
    %v269 = vperm.slane %v116, 0
    %v303 = vunpack.c.l.b16 %v82
    %v304 = vunpack.c.l.b16 %v83
    %v305 = vunpack.c.l.b16 %v84
    %v306 = vunpack.c.l.b16 %v85
    %v307 = vunpack.c.l.b16 %v86
    %v308 = vunpack.c.l.b16 %v87
    %v309 = vunpack.c.l.b16 %v88
    %v310 = vunpack.c.l.b16 %v89
    %v311 = vunpack.c.l.b16 %v90
    %v312 = vunpack.c.l.b16 %v91
    %v313 = vunpack.c.l.b16 %v92
    %v314 = vunpack.c.l.b16 %v93
    %v315 = vunpack.c.l.b16 %v94
    %v316 = vunpack.c.l.b16 %v95
    %v317 = vunpack.c.l.b16 %v96
    %v318 = vunpack.c.l.b16 %v97
    %v319 = vunpack.c.l.b16 %v98
    %v320 = vunpack.c.l.b16 %v99
    %v321 = vunpack.c.l.b16 %v100
    %v322 = vunpack.c.l.b16 %v101
    %v323 = vunpack.c.l.b16 %v102
    %v324 = vunpack.c.l.b16 %v103
    %v325 = vunpack.c.l.b16 %v104
    %v326 = vunpack.c.l.b16 %v105
    %v327 = vunpack.c.l.b16 %v106
    %v328 = vunpack.c.l.b16 %v107
    %v329 = vunpack.c.l.b16 %v108
    %v330 = vunpack.c.l.b16 %v109
    %v331 = vunpack.c.l.b16 %v110
    %v332 = vunpack.c.l.b16 %v111
    %v333 = vunpack.c.l.b16 %v112
    %v334 = vunpack.c.l.b16 %v113
    %v335 = vpack.c.b16 %v304, %v303
    %v336 = vpack.c.b16 %v306, %v305
    %v337 = vpack.c.b16 %v308, %v307
    %v338 = vpack.c.b16 %v310, %v309
    %v339 = vpack.c.b16 %v312, %v311
    %v340 = vpack.c.b16 %v314, %v313
    %v341 = vpack.c.b16 %v316, %v315
    %v342 = vpack.c.b16 %v318, %v317
    %v343 = vpack.c.b16 %v320, %v319
    %v344 = vpack.c.b16 %v322, %v321
    %v345 = vpack.c.b16 %v324, %v323
    %v346 = vpack.c.b16 %v326, %v325
    %v347 = vpack.c.b16 %v328, %v327
    %v348 = vpack.c.b16 %v330, %v329
    %v349 = vpack.c.b16 %v332, %v331
    %v350 = vpack.c.b16 %v334, %v333
    %367 = vmatpush.bf16.msra.mxu0 %v342
    %368 = vmatpush.bf16.msra.mxu0 %v341
    %369 = vmatpush.bf16.msra.mxu0 %v340
    %370 = vmatpush.bf16.msra.mxu0 %v339
    %371 = vmatpush.bf16.msra.mxu0 %v338
    %372 = vmatpush.bf16.msra.mxu0 %v337
    %373 = vmatpush.bf16.msra.mxu0 %v336
    %374 = vmatpush.bf16.msra.mxu0 %v335
    %375 = vmatmul.bf16.gmra.mxu0 %v266
    %v376 = vpop.f32.mrf.mxu0
    %v377 = vadd.f32 %v269, %v376
    %v378 = vpop.f32.mrf.mxu0
    %379 = vdwg.mxu0
    %380 = vmatpush.bf16.msra.mxu0 %v350
    %381 = vmatpush.bf16.msra.mxu0 %v349
    %382 = vmatpush.bf16.msra.mxu0 %v348
    %383 = vmatpush.bf16.msra.mxu0 %v347
    %384 = vmatpush.bf16.msra.mxu0 %v346
    %385 = vmatpush.bf16.msra.mxu0 %v345
    %386 = vmatpush.bf16.msra.mxu0 %v344
    %387 = vmatpush.bf16.msra.mxu0 %v343
    %388 = vmatmul.bf16.gmra.mxu0 %v267
    %v389 = vpop.f32.mrf.mxu0
    %v390 = vadd.f32 %v377, %v389
    %v391 = vpop.f32.mrf.mxu0
    %392 = vdwg.mxu0
    %393 = vst [vmem:[#allocation8] sm:$0xff] %v390
    %v394 = vrot.slane %v390, 4
    %v395 = vadd.f32 %v390, %v394
    %v396 = vrot.slane %v395, 2
    %v397 = vadd.f32 %v395, %v396
    %v398 = vrot.slane %v397, 1
    %v399 = vadd.f32 %v397, %v398
    %400 = vst [vmem:[#allocation9] sm:$0xff] %v399
    // Predicated region
    $region26: #{tpu_custom_call.1} parent=1 // pred_check
      _
    $region27: #{tpu_custom_call.1} parent=1 // pred_check_branch
      %402 = sbr.rel (0) target = $region29
    $region28: #{tpu_custom_call.1} parent=1 // pred_region
      %404 = vsyncadd [#allocation4], 0
      %s406 = sshll.u32 [#allocation8], 4
      %s407 = int_to_ptr.vmem [resolvable:$true] %s406
      %s408 = sshll.u32 %s3, 4
      %s409 = int_to_ptr.hbm [resolvable:$true] %s408
      %411 = dma.vmem_to_hbm [thread:$0]  %s407, 128, %s409, [#allocation4]
    $region29: #{tpu_custom_call.1} parent=1 // pred_fallthru
      _
    // Predicated region
    $region30: #{tpu_custom_call.1} parent=1 // pred_check
      _
    $region31: #{tpu_custom_call.1} parent=1 // pred_check_branch
      %413 = sbr.rel (0) target = $region33
    $region32: #{tpu_custom_call.1} parent=1 // pred_region
      %415 = vsyncadd [#allocation10], 0
      %s417 = sshll.u32 [#allocation9], 4
      %s418 = int_to_ptr.vmem [resolvable:$true] %s417
      %s419 = sshll.u32 %s4, 4
      %s420 = int_to_ptr.hbm [resolvable:$true] %s419
      %422 = dma.vmem_to_hbm [thread:$0]  %s418, 128, %s420, [#allocation10]
    $region33: #{tpu_custom_call.1} parent=1 // pred_fallthru
      _
    // Predicated region
    $region34: #{tpu_custom_call.1} parent=1 // pred_check
      _
    $region35: #{tpu_custom_call.1} parent=1 // pred_check_branch
      %424 = sbr.rel (0) target = $region37
    $region36: #{tpu_custom_call.1} parent=1 // pred_region
      %426 = dma.done [#allocation4], 128
    $region37: #{tpu_custom_call.1} parent=1 // pred_fallthru
      _
    // Predicated region
    $region38: #{tpu_custom_call.1} parent=1 // pred_check
      _
    $region39: #{tpu_custom_call.1} parent=1 // pred_check_branch
      %428 = sbr.rel (0) target = $region41
    $region40: #{tpu_custom_call.1} parent=1 // pred_region
      %430 = dma.done [#allocation10], 128
    $region41: #{tpu_custom_call.1} parent=1 // pred_fallthru
      _
    %431 = vsyncpa [#allocation3], 1
    %432 = vsyncpa [#allocation6], 1
    %433 = vsyncpa [#allocation4], 1
    %434 = vsyncpa [#allocation10], 1

</llo_original>
